<compile_context>
chip_gen: v5e
topology: v5e:2x2
jax: 0.10.0
libtpu: 0.0.40
codegen_flags: <defaults>
</compile_context>

<pallas_src>
import functools
import math

import numpy as np
import jax
import jax.numpy as jnp
from jax import lax
from jax.experimental import pallas as pl
from jax.experimental.pallas import tpu as pltpu


# ----------------------------------------------------------------------------
# Positional encoder (numpy, identical to the PyTorch helper)
# ----------------------------------------------------------------------------
def positional_encoder(max_pos, d_model):
    pos = np.arange(max_pos)[:, None]
    i = np.arange(d_model)[None, :]
    angle_rates = 1.0 / np.power(10000, 2 * (i // 2) / np.float32(d_model))
    angle_rads = pos * angle_rates
    angle_rads[:, 0::2] = np.sin(angle_rads[:, 0::2])
    angle_rads[:, 1::2] = np.cos(angle_rads[:, 1::2])
    return jnp.asarray(angle_rads[None, ...], dtype=jnp.float32)  # (1, max_pos, d)


# ----------------------------------------------------------------------------
# Kernel 1: embedding linear, scale and positional encoding fused
#   out = (x @ W) * sqrt(d) + (b * sqrt(d) + pe)      (additive term precomputed on host)
# ----------------------------------------------------------------------------
def embed_kernel(x_ref, w_ref, add_ref, o_ref, *, scale):
    y = jnp.dot(x_ref[...], w_ref[...], preferred_element_type=jnp.float32)
    o_ref[...] = y * scale + add_ref[...]


def embed_forward(x, w, b, pe, d_model):
    bs, F, S = x.shape
    x_flat = x.reshape(bs, F * S)
    scale = math.sqrt(d_model)
    # fold bias*scale + positional encoding into a single additive term (host side)
    add = (b * scale + pe[:, :S, :].reshape(1, S * d_model)).astype(jnp.float32)
    out = pl.pallas_call(
        functools.partial(embed_kernel, scale=scale),
        out_shape=jax.ShapeDtypeStruct((bs, S * d_model), jnp.float32),
    )(x_flat, w, add)
    # token relayout (lane -> sublane) done by XLA between the two pallas_calls
    return out.reshape(bs * S, d_model)


# ----------------------------------------------------------------------------
# Kernel 2: fused encoder-layer stack.
# Grid = (num_layers,); activation (bs*S, D) held resident in a VMEM scratch.
# Per-layer weights are stacked on a leading axis and indexed by the grid step.
# ----------------------------------------------------------------------------
def encoder_stack_kernel(y_ref, wq_ref, bq_ref, wk_ref, bk_ref, wv_ref, bv_ref,
                         wo_ref, bo_ref, g_ref, beta_ref,
                         w1_ref, b1_ref, w2_ref, b2_ref,
                         o_ref, acc_ref, *, batch, seq, heads, d_k):
    layer = pl.program_id(0)
    f32 = jnp.float32

    @pl.when(layer == 0)
    def _():
        acc_ref[...] = y_ref[...]

    y = acc_ref[...]                                   # (M, D), M = batch*seq
    M, D = y.shape

    # ---- multi-head attention, heads batched on a leading (major) axis ------
    yb = jnp.broadcast_to(y[None, :, :], (heads, M, D))
    q = jnp.einsum('hmd,hdk->hmk', yb, wq_ref[...],
                   preferred_element_type=f32) + bq_ref[...]
    k = jnp.einsum('hmd,hdk->hmk', yb, wk_ref[...],
                   preferred_element_type=f32) + bk_ref[...]
    v = jnp.einsum('hmd,hdk->hmk', yb, wv_ref[...],
                   preferred_element_type=f32) + bv_ref[...]

    inv_sqrt_dk = 1.0 / math.sqrt(d_k)
    attn_rows = []
    for b in range(batch):                             # static, small batch loop
        lo = b * seq
        qb = q[:, lo:lo + seq, :]                      # (H, S, d_k)
        kb = k[:, lo:lo + seq, :]
        vb = v[:, lo:lo + seq, :]
        s = jnp.einsum('hqd,hkd->hqk', qb, kb,
                       preferred_element_type=f32) * inv_sqrt_dk
        s = s - jnp.max(s, axis=-1, keepdims=True)
        p = jnp.exp(s)
        p = p * pl.reciprocal(jnp.sum(p, axis=-1, keepdims=True), approx=True)
        o = jnp.einsum('hqk,hkd->hqd', p, vb, preferred_element_type=f32)
        # per-head output projection, accumulated over heads (no concat)
        oh = jnp.einsum('hqd,hdn->hqn', o, wo_ref[...],
                        preferred_element_type=f32)
        attn_rows.append(jnp.sum(oh, axis=0))          # (S, D)
    attn = jnp.concatenate(attn_rows, axis=0) + bo_ref[...]

    g = g_ref[...]
    beta = beta_ref[...]

    def layer_norm(t):
        mu = jnp.mean(t, axis=-1, keepdims=True)
        var = jnp.mean((t - mu) ** 2, axis=-1, keepdims=True)
        return (t - mu) * lax.rsqrt(var + 1e-5) * g + beta

    # ---- residual + LayerNorm (norm_1) ---------------------------------------
    out1 = layer_norm(y + attn)

    # ---- feed-forward: relu(out1 @ W1 + b1) @ W2 + b2 (batch folded in M) -----
    f = jnp.maximum(
        jnp.dot(out1, w1_ref[...], preferred_element_type=f32) + b1_ref[...], 0.0)
    f = jnp.dot(f, w2_ref[...], preferred_element_type=f32) + b2_ref[...]

    # residual + LayerNorm — the PyTorch module reuses norm_1 here (reproduced)
    out2 = layer_norm(out1 + f)

    acc_ref[...] = out2
    o_ref[...] = out2


def encoder_stack_forward(y0, stacked, num_layers, batch, seq, d_model, heads):
    M = batch * seq
    d_k = d_model // heads

    def layer_spec(arr):
        zeros = (0,) * (arr.ndim - 1)
        return pl.BlockSpec((pl.Squeezed(),) + tuple(arr.shape[1:]),
                            lambda l, _z=zeros: (l,) + _z)

    ordered = [stacked[k] for k in
               ("wq", "bq", "wk", "bk", "wv", "bv", "wo", "bo",
                "g", "beta", "w1", "b1", "w2", "b2")]

    resident = pl.BlockSpec((M, d_model), lambda l: (0, 0))

    return pl.pallas_call(
        functools.partial(encoder_stack_kernel, batch=batch, seq=seq,
                          heads=heads, d_k=d_k),
        out_shape=jax.ShapeDtypeStruct((M, d_model), jnp.float32),
        grid=(num_layers,),
        in_specs=[resident] + [layer_spec(a) for a in ordered],
        out_specs=pl.BlockSpec((M, d_model), lambda l: (0, 0)),
        scratch_shapes=[pltpu.VMEM((M, d_model), jnp.float32)],
        compiler_params=pltpu.CompilerParams(dimension_semantics=("arbitrary",)),
    )(y0, *ordered)


# ----------------------------------------------------------------------------
# Host-side weight restructuring: per-layer dicts -> stacked, head-major layouts
# ----------------------------------------------------------------------------
def stack_layer_params(layers, d_model, heads):
    d_k = d_model // heads

    def st(fn):
        return jnp.stack([fn(p) for p in layers], axis=0)

    return dict(
        wq=st(lambda p: p["wq"].reshape(d_model, heads, d_k).transpose(1, 0, 2)),
        bq=st(lambda p: p["bq"].reshape(heads, d_k)[:, None, :]),
        wk=st(lambda p: p["wk"].reshape(d_model, heads, d_k).transpose(1, 0, 2)),
        bk=st(lambda p: p["bk"].reshape(heads, d_k)[:, None, :]),
        wv=st(lambda p: p["wv"].reshape(d_model, heads, d_k).transpose(1, 0, 2)),
        bv=st(lambda p: p["bv"].reshape(heads, d_k)[:, None, :]),
        wo=st(lambda p: p["wo"].reshape(heads, d_k, d_model)),
        bo=st(lambda p: p["bo"]),
        g=st(lambda p: p["g1"]),
        beta=st(lambda p: p["beta1"]),
        w1=st(lambda p: p["w1"]),
        b1=st(lambda p: p["b1"]),
        w2=st(lambda p: p["w2"]),
        b2=st(lambda p: p["b2"]),
    )


# ----------------------------------------------------------------------------
# Full Encoder forward (Pallas path)
# ----------------------------------------------------------------------------
def encoder_forward(x, embed_w, embed_b, pe, layers, d_model, heads):
    bs, F, S = x.shape
    y0 = embed_forward(x, embed_w, embed_b, pe, d_model)          # (bs*S, D)
    stacked = stack_layer_params(layers, d_model, heads)
    y = encoder_stack_forward(y0, stacked, len(layers), bs, S, d_model, heads)
    return y.reshape(bs, S, d_model)


# ----------------------------------------------------------------------------
# Pure-JAX reference (mirrors the PyTorch forward exactly, eval mode)
# ----------------------------------------------------------------------------
def reference_forward(x, embed_w, embed_b, pe, layers, d_model, heads):
    bs, F, S = x.shape
    d_k = d_model // heads
    y = x.reshape(bs, -1) @ embed_w + embed_b[0]
    y = y * math.sqrt(d_model)
    y = y.reshape(bs, S, d_model) + pe[:, :S, :]

    for p in layers:
        def split(t):
            return t.reshape(bs, S, heads, d_k).transpose(0, 2, 1, 3)

        q = split(y @ p["wq"] + p["bq"][0])
        k = split(y @ p["wk"] + p["bk"][0])
        v = split(y @ p["wv"] + p["bv"][0])
        scores = jnp.einsum("bhqd,bhkd->bhqk", q, k) / math.sqrt(d_k)
        scores = jax.nn.softmax(scores, axis=-1)
        out = jnp.einsum("bhqk,bhkd->bhqd", scores, v)
        concat = out.transpose(0, 2, 1, 3).reshape(bs, S, d_model)
        attn = concat @ p["wo"] + p["bo"][0]

        def ln(t):
            mu = jnp.mean(t, -1, keepdims=True)
            var = jnp.mean((t - mu) ** 2, -1, keepdims=True)
            return (t - mu) / jnp.sqrt(var + 1e-5) * p["g1"][0] + p["beta1"][0]

        out1 = ln(y + attn)
        f = jax.nn.relu(out1 @ p["w1"] + p["b1"][0]) @ p["w2"] + p["b2"][0]
        y = ln(out1 + f)
    return y


# ----------------------------------------------------------------------------
# Deterministic parameter construction
# ----------------------------------------------------------------------------
def make_params(key, d_model, dff, seq_len, fd_feature, num_layers):
    keys = jax.random.split(key, 4 + num_layers)
    n = lambda k, shape, s=0.1: (s * jax.random.normal(k, shape)).astype(jnp.float32)

    embed_w = n(keys[0], (seq_len * fd_feature, seq_len * d_model))
    embed_b = n(keys[1], (1, seq_len * d_model))

    layers = []
    for li in range(num_layers):
        lk = jax.random.split(keys[4 + li], 12)
        layers.append(dict(
            wq=n(lk[0], (d_model, d_model)), bq=n(lk[1], (1, d_model)),
            wk=n(lk[2], (d_model, d_model)), bk=n(lk[3], (1, d_model)),
            wv=n(lk[4], (d_model, d_model)), bv=n(lk[5], (1, d_model)),
            wo=n(lk[6], (d_model, d_model)), bo=n(lk[7], (1, d_model)),
            g1=(1.0 + n(lk[8], (1, d_model))), beta1=n(lk[9], (1, d_model)),
            w1=n(lk[10], (d_model, dff)), b1=jnp.zeros((1, dff), jnp.float32),
            w2=n(lk[11], (dff, d_model)), b2=jnp.zeros((1, d_model), jnp.float32),
        ))
    return embed_w, embed_b, layers


# ----------------------------------------------------------------------------
if __name__ == "__main__":
    # Small, module-consistent shapes
    BS, FD_FEATURE, SEQ_LEN = 2, 4, 8
    D_MODEL, HEADS, DFF, NUM_LAYERS = 32, 4, 64, 2

    key = jax.random.PRNGKey(0)
    kx, kp = jax.random.split(key)
    x = jax.random.normal(kx, (BS, FD_FEATURE, SEQ_LEN), dtype=jnp.float32)

    embed_w, embed_b, layers = make_params(
        kp, D_MODEL, DFF, SEQ_LEN, FD_FEATURE, NUM_LAYERS)
    pe = positional_encoder(100, D_MODEL)

    out = encoder_forward(x, embed_w, embed_b, pe, layers, D_MODEL, HEADS)
    out = jax.block_until_ready(out)

    ref = reference_forward(x, embed_w, embed_b, pe, layers, D_MODEL, HEADS)
    ref = jax.block_until_ready(ref)

    # tolerance accounts for the EUP approximate reciprocal in the softmax
    np.testing.assert_allclose(np.asarray(out), np.asarray(ref),
                               rtol=5e-3, atol=5e-3)
    assert out.shape == (BS, SEQ_LEN, D_MODEL)
    print("KERNEL_OK")
</pallas_src>

<mosaic_0001>
module attributes {stable_mosaic.version = 11 : i64} {
  func.func @embed_kernel(%arg0: memref<2x32xf32, #tpu.memory_space<vmem>>, %arg1: memref<32x256xf32, #tpu.memory_space<vmem>>, %arg2: memref<1x256xf32, #tpu.memory_space<vmem>>, %arg3: memref<2x256xf32, #tpu.memory_space<vmem>>) attributes {dimension_semantics = [], scalar_prefetch = 0 : i64, scratch_operands = 0 : i64, tpu.core_type = #tpu.core_type<tc>} {
    %c0 = arith.constant 0 : index
    %c0_0 = arith.constant 0 : index
    %0 = vector.load %arg0[%c0, %c0_0] : memref<2x32xf32, #tpu.memory_space<vmem>>, vector<2x32xf32>
    %c0_1 = arith.constant 0 : index
    %c0_2 = arith.constant 0 : index
    %1 = vector.load %arg1[%c0_1, %c0_2] : memref<32x256xf32, #tpu.memory_space<vmem>>, vector<32x256xf32>
    %cst = arith.constant dense<0.000000e+00> : vector<2x256xf32>
    %2 = tpu.matmul %0, %1, %cst {dimension_numbers = #tpu.dot_dimension_numbers<[1], [0], [0], [1], [0, 0, 1, 1], [], []>} : vector<2x32xf32>, vector<32x256xf32>, vector<2x256xf32> -> vector<2x256xf32>
    %cst_3 = arith.constant 5.65685415 : f32
    %3 = vector.broadcast %cst_3 : f32 to vector<2x256xf32>
    %4 = arith.mulf %2, %3 : vector<2x256xf32>
    %c0_4 = arith.constant 0 : index
    %c0_5 = arith.constant 0 : index
    %5 = vector.load %arg2[%c0_4, %c0_5] : memref<1x256xf32, #tpu.memory_space<vmem>>, vector<1x256xf32>
    %6 = vector.broadcast %5 : vector<1x256xf32> to vector<2x256xf32>
    %7 = arith.addf %4, %6 : vector<2x256xf32>
    %c0_6 = arith.constant 0 : index
    %c0_7 = arith.constant 0 : index
    %8 = vector.load %arg3[%c0_6, %c0_7] : memref<2x256xf32, #tpu.memory_space<vmem>>, vector<2x256xf32>
    tpu.vector_store %arg3[%c0_6, %c0_7], %7 {strides = array<i32>} : memref<2x256xf32, #tpu.memory_space<vmem>>, vector<2x256xf32>,
    return
  }
}

</mosaic_0001>

<llo_original>
// kernel: tpu_custom_call.1
$region0: #{tpu_custom_call.1}
  #allocation0 [shape = 'u32[]', space=smem, size = 0x4, offset = 0x4, fixed_abs, tag = 'smem constant byte address 0x4 - core index']
  #allocation1 [shape = 'u32[72,128]{1,0:T(1,128)}', space=vmem, size = 0x9000, scoped, tag = 'internal scratch']
  %s0 = inlined_call_operand.hbm [shape: f32[2,32], index: 0, kind: input, shape index: {}]
  %s1 = inlined_call_operand.hbm [shape: f32[32,256], index: 1, kind: input, shape index: {}]
  %s2 = inlined_call_operand.hbm [shape: f32[1,256], index: 2, kind: input, shape index: {}]
  %s3 = inlined_call_operand.hbm [shape: f32[2,256], index: 3, kind: output, shape index: {}]
  %s4 = sld [smem:[#allocation0]]
  $region34: #{tpu_custom_call.1} parent=0
    _
  %s6 = ssub.s32 1, %s4
  %s7 = scalar_select 0, %s6, %s4
  $region1: #{tpu_custom_call.1} parent=0
    #allocation2 [shape = 'u8[1024]{0}', space=vmem, size = 0x400, scoped, tag = 'input window, operand 0, single buffered']
    #allocation3 [shape = 's32[1]{0}', space=sflag, size = 0x4, scoped, tag = 'scoped memory for tpu_custom_call.1']
    #allocation4 [shape = 's32[1]{0}', space=sflag, size = 0x4, scoped, tag = 'scoped memory for tpu_custom_call.1']
    #allocation5 [shape = 'u8[32768]{0}', space=vmem, size = 0x8000, scoped, tag = 'input window, operand 1, single buffered']
    #allocation6 [shape = 's32[1]{0}', space=sflag, size = 0x4, scoped, tag = 'scoped memory for tpu_custom_call.1']
    #allocation7 [shape = 'u8[1024]{0}', space=vmem, size = 0x400, scoped, tag = 'input window, operand 2, single buffered']
    #allocation8 [shape = 'u8[2048]{0}', space=vmem, size = 0x800, scoped, tag = 'output window, operand 0, single buffered']
    %8 = vsyncpa [#allocation3], 0
    %9 = vsyncpa [#allocation6], 0
    %10 = vsyncpa [#allocation4], 0
    // Predicated region
    $region2: #{tpu_custom_call.1} parent=1 // pred_check
      _
    $region3: #{tpu_custom_call.1} parent=1 // pred_check_branch
      %12 = sbr.rel (0) target = $region5
    $region4: #{tpu_custom_call.1} parent=1 // pred_region
      %14 = vsyncadd [#allocation3], 0
      %s16 = sshll.u32 %s0, 4
      %s17 = int_to_ptr.hbm [resolvable:$true] %s16
      %s18 = sshll.u32 [#allocation2], 4
      %s19 = int_to_ptr.vmem [resolvable:$true] %s18
      %21 = dma.hbm_to_vmem [thread:$0]  %s17, 32, %s19, [#allocation3]
    $region5: #{tpu_custom_call.1} parent=1 // pred_fallthru
      _
    // Predicated region
    $region6: #{tpu_custom_call.1} parent=1 // pred_check
      _
    $region7: #{tpu_custom_call.1} parent=1 // pred_check_branch
      %23 = sbr.rel (0) target = $region9
    $region8: #{tpu_custom_call.1} parent=1 // pred_region
      %25 = vsyncadd [#allocation6], 0
      %s26 = sshll.u32 %s1, 4
      %s27 = int_to_ptr.hbm [resolvable:$true] %s26
      %s28 = sshll.u32 [#allocation5], 4
      %s29 = int_to_ptr.vmem [resolvable:$true] %s28
      %34 = dma.hbm_to_vmem [thread:$0]  %s27, 1024, %s29, [#allocation6], 256, 256, 16
    $region9: #{tpu_custom_call.1} parent=1 // pred_fallthru
      _
    // Predicated region
    $region10: #{tpu_custom_call.1} parent=1 // pred_check
      _
    $region11: #{tpu_custom_call.1} parent=1 // pred_check_branch
      %36 = sbr.rel (0) target = $region13
    $region12: #{tpu_custom_call.1} parent=1 // pred_region
      %38 = vsyncadd [#allocation6], 0
      %s40 = sshll.u32 %s2, 4
      %s41 = int_to_ptr.hbm [resolvable:$true] %s40
      %s42 = sshll.u32 [#allocation7], 4
      %s43 = int_to_ptr.vmem [resolvable:$true] %s42
      %45 = dma.hbm_to_vmem [thread:$0]  %s41, 32, %s43, [#allocation6]
    $region13: #{tpu_custom_call.1} parent=1 // pred_fallthru
      _
    // Predicated region
    $region14: #{tpu_custom_call.1} parent=1 // pred_check
      _
    $region15: #{tpu_custom_call.1} parent=1 // pred_check_branch
      %47 = sbr.rel (0) target = $region17
    $region16: #{tpu_custom_call.1} parent=1 // pred_region
      %49 = dma.done [#allocation3], 32
    $region17: #{tpu_custom_call.1} parent=1 // pred_fallthru
      _
    // Predicated region
    $region18: #{tpu_custom_call.1} parent=1 // pred_check
      _
    $region19: #{tpu_custom_call.1} parent=1 // pred_check_branch
      %51 = sbr.rel (0) target = $region21
    $region20: #{tpu_custom_call.1} parent=1 // pred_region
      %53 = dma.done [#allocation6], 1024
    $region21: #{tpu_custom_call.1} parent=1 // pred_fallthru
      _
    // Predicated region
    $region22: #{tpu_custom_call.1} parent=1 // pred_check
      _
    $region23: #{tpu_custom_call.1} parent=1 // pred_check_branch
      %55 = sbr.rel (0) target = $region25
    $region24: #{tpu_custom_call.1} parent=1 // pred_region
      %57 = dma.done [#allocation6], 32
    $region25: #{tpu_custom_call.1} parent=1 // pred_fallthru
      _
    %v58 = vld [vmem:[#allocation2] sm:$0x3]
    %v59 = vld [vmem:[#allocation5] sm:$0xff]
    %v60 = vld [vmem:[#allocation5 + $0x8] sm:$0xff]
    %v61 = vld [vmem:[#allocation5 + $0x10] sm:$0xff]
    %v62 = vld [vmem:[#allocation5 + $0x18] sm:$0xff]
    %v63 = vld [vmem:[#allocation5 + $0x20] sm:$0xff]
    %v64 = vld [vmem:[#allocation5 + $0x28] sm:$0xff]
    %v65 = vld [vmem:[#allocation5 + $0x30] sm:$0xff]
    %v66 = vld [vmem:[#allocation5 + $0x38] sm:$0xff]
    %vm67 = vcmask 261120
    %v69 = vsel %vm67, %v58, 0
    %71 = vmatpush.msra.mxu0 0.0
    %72 = vmatpush.msra.mxu0 0.0
    %73 = vmatpush.msra.mxu0 0.0
    %74 = vmatpush.msra.mxu0 0.0
    %75 = vmatpush.msra.mxu0 0.0
    %76 = vmatpush.msra.mxu0 0.0
    %77 = vmatpush.msra.mxu0 0.0
    %78 = vmatpush.msra.mxu0 0.0
    %79 = vmatpush.msra.mxu0 0.0
    %80 = vmatpush.msra.mxu0 0.0
    %81 = vmatpush.msra.mxu0 0.0
    %82 = vmatpush.msra.mxu0 0.0
    %83 = vmatpush.msra.mxu0 %v65
    %84 = vmatpush.msra.mxu0 %v63
    %85 = vmatpush.msra.mxu0 %v61
    %86 = vmatpush.msra.mxu0 %v59
    %87 = vmatmul.f32.gmra.mxu0 %v69
    %v88 = vpop.f32.mrf.mxu0
    %v89 = vadd.f32 0.0, %v88
    %90 = vdwg.mxu0
    %91 = vmatpush.msra.mxu0 0.0
    %92 = vmatpush.msra.mxu0 0.0
    %93 = vmatpush.msra.mxu0 0.0
    %94 = vmatpush.msra.mxu0 0.0
    %95 = vmatpush.msra.mxu0 0.0
    %96 = vmatpush.msra.mxu0 0.0
    %97 = vmatpush.msra.mxu0 0.0
    %98 = vmatpush.msra.mxu0 0.0
    %99 = vmatpush.msra.mxu0 0.0
    %100 = vmatpush.msra.mxu0 0.0
    %101 = vmatpush.msra.mxu0 0.0
    %102 = vmatpush.msra.mxu0 0.0
    %103 = vmatpush.msra.mxu0 %v66
    %104 = vmatpush.msra.mxu0 %v64
    %105 = vmatpush.msra.mxu0 %v62
    %106 = vmatpush.msra.mxu0 %v60
    %107 = vmatmul.f32.gmra.mxu0 %v69
    %v108 = vpop.f32.mrf.mxu0
    %v109 = vadd.f32 0.0, %v108
    %110 = vdwg.mxu0
    %v111 = vmul.f32 %v89, 5.656854
    %v112 = vmul.f32 %v109, 5.656854
    %v113 = vld [vmem:[#allocation7] sm:$0x3]
    %v115 = vperm.slane %v113, 0
    %v116 = vperm.slane %v113, 1
    %v119 = vadd.f32 %v111, %v115
    %v120 = vadd.f32 %v112, %v116
    %v123 = vrot.slane %v120, 6
    %vm124 = vcmask 1041408
    %v125 = vsel %vm124, %v119, %v123
    %127 = vst [vmem:[#allocation8] sm:$0xf] %v125
    // Predicated region
    $region26: #{tpu_custom_call.1} parent=1 // pred_check
      _
    $region27: #{tpu_custom_call.1} parent=1 // pred_check_branch
      %129 = sbr.rel (0) target = $region29
    $region28: #{tpu_custom_call.1} parent=1 // pred_region
      %131 = vsyncadd [#allocation4], 0
      %s133 = sshll.u32 [#allocation8], 4
      %s134 = int_to_ptr.vmem [resolvable:$true] %s133
      %s135 = sshll.u32 %s3, 4
      %s136 = int_to_ptr.hbm [resolvable:$true] %s135
      %138 = dma.vmem_to_hbm [thread:$0]  %s134, 64, %s136, [#allocation4]
    $region29: #{tpu_custom_call.1} parent=1 // pred_fallthru
      _
    // Predicated region
    $region30: #{tpu_custom_call.1} parent=1 // pred_check
      _
    $region31: #{tpu_custom_call.1} parent=1 // pred_check_branch
      %140 = sbr.rel (0) target = $region33
    $region32: #{tpu_custom_call.1} parent=1 // pred_region
      %142 = dma.done [#allocation4], 64
    $region33: #{tpu_custom_call.1} parent=1 // pred_fallthru
      _
    %143 = vsyncpa [#allocation3], 1
    %144 = vsyncpa [#allocation6], 1
    %145 = vsyncpa [#allocation4], 1

</llo_original>
